<compile_context>
chip_gen: v6e
topology: v6e:2x2x1
jax: 0.10.0
libtpu: 0.0.40
codegen_flags: <defaults>
</compile_context>

<pallas_src>
import jax
import jax.numpy as jnp
from jax.experimental import pallas as pl
from jax.experimental.pallas import tpu as pltpu


def _context_atten_kernel(mt_ref, hc_ref, wm_ref, w1t_ref, v_ref,
                          alphat_ref, ct_ref):
    # mt_ref    : (C, H)  context memory slice Mt                      VMEM
    # hc_ref    : (1, H)  flattened decoder state hc                   VMEM
    # wm_ref    : (H, H)  Wm                                           VMEM
    # w1t_ref   : (H, H)  linear1.weight.T  (so hc @ w1t == linear1)   VMEM
    # v_ref     : (1, H)  V laid out as a lane row                     VMEM
    # alphat_ref: (C, 1)  log-softmax attention weights (column)       VMEM out
    # ct_ref    : (1, H)  context vector                               VMEM out
    mt = mt_ref[...]

    # linear1(hc) = hc @ W1.T                                  -> (1, H)   MXU
    hproj = jnp.dot(hc_ref[...], w1t_ref[...],
                    preferred_element_type=jnp.float32,
                    precision=jax.lax.Precision.HIGHEST)
    # Mt @ Wm                                                  -> (C, H)   MXU
    mproj = jnp.dot(mt, wm_ref[...],
                    preferred_element_type=jnp.float32,
                    precision=jax.lax.Precision.HIGHEST)

    # ones(C,1) @ linear1(hc) is just a sublane broadcast of hproj.
    act = jnp.tanh(mproj + hproj)                              # (C, H)  tanh -> EUP

    # At = act @ V as a lane multiply + cross-lane reduce (no tiny MXU matvec).
    scores = jnp.sum(act * v_ref[...], axis=1, keepdims=True)  # (C, 1)   VPU+XLU

    # Numerically stable log_softmax over the C scores.
    m = jnp.max(scores, axis=0, keepdims=True)                 # (1, 1)
    z = scores - m
    lse = jnp.log(jnp.sum(jnp.exp(z), axis=0, keepdims=True))  # (1, 1)   EUP+XLU
    log_alpha = z - lse                                        # (C, 1)

    alphat_ref[...] = log_alpha
    # ct = alphat @ Mt  == sum_c log_alpha[c] * Mt[c, :]       -> (1, H)
    ct_ref[...] = jnp.sum(log_alpha * mt, axis=0, keepdims=True)


def context_atten_forward(inputs, hc, Wm, V, W1, context_window):
    """inputs: (T, 1, H); hc: reshapeable to (1, H). Returns (alphat, ct)."""
    T, B, H = inputs.shape
    # Static slice + flatten (wrapper glue, matches inputs[-C-1:-1].view(C, H)).
    mt = inputs[-context_window - 1:-1].reshape(context_window, H).astype(jnp.float32)
    hc_row = hc.reshape(1, -1).astype(jnp.float32)             # (1, H)
    wm = Wm.astype(jnp.float32)                                # (H, H)
    w1t = W1.T.astype(jnp.float32)                             # (H, H): hc @ W1.T
    v_row = V.reshape(1, -1).astype(jnp.float32)               # (1, H)

    alphat_col, ct = pl.pallas_call(
        _context_atten_kernel,
        out_shape=(
            jax.ShapeDtypeStruct((context_window, 1), jnp.float32),
            jax.ShapeDtypeStruct((1, H), jnp.float32),
        ),
        in_specs=[pl.BlockSpec(memory_space=pltpu.VMEM)] * 5,
        out_specs=(pl.BlockSpec(memory_space=pltpu.VMEM),
                   pl.BlockSpec(memory_space=pltpu.VMEM)),
    )(mt, hc_row, wm, w1t, v_row)

    # Present alphat in the reference (1, C) layout; metadata-only reshape.
    return alphat_col.reshape(1, context_window), ct


def context_atten_reference(inputs, hc, Wm, V, W1, context_window):
    H = inputs.shape[-1]
    Mt = inputs[-context_window - 1:-1].reshape(context_window, H)
    lin = jnp.dot(hc.reshape(1, -1), W1.T, precision=jax.lax.Precision.HIGHEST)
    one_TL = jnp.ones((context_window, 1), jnp.float32)
    At = jnp.dot(
        jnp.tanh(jnp.dot(Mt, Wm, precision=jax.lax.Precision.HIGHEST)
                 + jnp.dot(one_TL, lin, precision=jax.lax.Precision.HIGHEST)),
        V, precision=jax.lax.Precision.HIGHEST)                 # (C, 1)
    alphat = jax.nn.log_softmax(At.reshape(1, -1), axis=1)      # (1, C)
    ct = jnp.dot(alphat, Mt, precision=jax.lax.Precision.HIGHEST)  # (1, H)
    return alphat, ct


if __name__ == "__main__":
    hidden_dim = 32
    context_window = 3
    seq_len = 8          # needs seq_len >= context_window + 1
    batch = 1            # .view(context_window, hidden_dim) in the spec implies batch == 1

    key = jax.random.PRNGKey(0)
    k_in, k_hc, k_wm, k_v, k_w1 = jax.random.split(key, 5)

    inputs = jax.random.normal(k_in, (seq_len, batch, hidden_dim), jnp.float32)
    hc = jax.random.normal(k_hc, (1, hidden_dim), jnp.float32)

    # Parameters. (Module inits Wm/V to ones; random values give a stricter check.)
    Wm = jax.random.normal(k_wm, (hidden_dim, hidden_dim), jnp.float32)
    V = jax.random.normal(k_v, (hidden_dim, 1), jnp.float32)
    bound = 1.0 / jnp.sqrt(jnp.float32(hidden_dim))     # nn.Linear default init range
    W1 = jax.random.uniform(k_w1, (hidden_dim, hidden_dim), jnp.float32, -bound, bound)

    alphat, ct = context_atten_forward(inputs, hc, Wm, V, W1, context_window)
    alphat, ct = jax.block_until_ready((alphat, ct))

    alphat_ref, ct_ref = context_atten_reference(inputs, hc, Wm, V, W1, context_window)

    assert alphat.shape == (1, context_window)
    assert ct.shape == (1, hidden_dim)
    assert jnp.allclose(alphat, alphat_ref, atol=1e-4, rtol=1e-4), "alphat mismatch"
    assert jnp.allclose(ct, ct_ref, atol=1e-4, rtol=1e-4), "ct mismatch"

    print("KERNEL_OK")
</pallas_src>

<mosaic_0001>
module attributes {stable_mosaic.version = 11 : i64} {
  func.func @_context_atten_kernel(%arg0: memref<3x32xf32, #tpu.memory_space<vmem>>, %arg1: memref<1x32xf32, #tpu.memory_space<vmem>>, %arg2: memref<32x32xf32, #tpu.memory_space<vmem>>, %arg3: memref<32x32xf32, #tpu.memory_space<vmem>>, %arg4: memref<1x32xf32, #tpu.memory_space<vmem>>, %arg5: memref<3x1xf32, #tpu.memory_space<vmem>>, %arg6: memref<1x32xf32, #tpu.memory_space<vmem>>) attributes {dimension_semantics = [], scalar_prefetch = 0 : i64, scratch_operands = 0 : i64, tpu.core_type = #tpu.core_type<tc>} {
    %c0 = arith.constant 0 : index
    %c0_0 = arith.constant 0 : index
    %0 = vector.load %arg0[%c0, %c0_0] : memref<3x32xf32, #tpu.memory_space<vmem>>, vector<3x32xf32>
    %c0_1 = arith.constant 0 : index
    %c0_2 = arith.constant 0 : index
    %1 = vector.load %arg1[%c0_1, %c0_2] : memref<1x32xf32, #tpu.memory_space<vmem>>, vector<1x32xf32>
    %c0_3 = arith.constant 0 : index
    %c0_4 = arith.constant 0 : index
    %2 = vector.load %arg3[%c0_3, %c0_4] : memref<32x32xf32, #tpu.memory_space<vmem>>, vector<32x32xf32>
    %cst = arith.constant dense<0.000000e+00> : vector<1x32xf32>
    %3 = tpu.matmul %1, %2, %cst {dimension_numbers = #tpu.dot_dimension_numbers<[1], [0], [0], [1], [0, 0, 1, 1], [], []>, precision = #tpu.contract_precision<fp32>} : vector<1x32xf32>, vector<32x32xf32>, vector<1x32xf32> -> vector<1x32xf32>
    %c0_5 = arith.constant 0 : index
    %c0_6 = arith.constant 0 : index
    %4 = vector.load %arg2[%c0_5, %c0_6] : memref<32x32xf32, #tpu.memory_space<vmem>>, vector<32x32xf32>
    %cst_7 = arith.constant dense<0.000000e+00> : vector<3x32xf32>
    %5 = tpu.matmul %0, %4, %cst_7 {dimension_numbers = #tpu.dot_dimension_numbers<[1], [0], [0], [1], [0, 0, 1, 1], [], []>, precision = #tpu.contract_precision<fp32>} : vector<3x32xf32>, vector<32x32xf32>, vector<3x32xf32> -> vector<3x32xf32>
    %6 = vector.broadcast %3 : vector<1x32xf32> to vector<3x32xf32>
    %7 = arith.addf %5, %6 : vector<3x32xf32>
    %8 = math.tanh %7 : vector<3x32xf32>
    %c0_8 = arith.constant 0 : index
    %c0_9 = arith.constant 0 : index
    %9 = vector.load %arg4[%c0_8, %c0_9] : memref<1x32xf32, #tpu.memory_space<vmem>>, vector<1x32xf32>
    %10 = vector.broadcast %9 : vector<1x32xf32> to vector<3x32xf32>
    %11 = arith.mulf %8, %10 : vector<3x32xf32>
    %cst_10 = arith.constant dense<0.000000e+00> : vector<3xf32>
    %12 = vector.multi_reduction <add>, %11, %cst_10 [1] : vector<3x32xf32> to vector<3xf32>
    %13 = vector.shape_cast %12 : vector<3xf32> to vector<3x1xf32>
    %cst_11 = arith.constant dense<0xFF800000> : vector<1xf32>
    %14 = vector.multi_reduction <maximumf>, %13, %cst_11 [0] : vector<3x1xf32> to vector<1xf32>
    %15 = vector.shape_cast %14 : vector<1xf32> to vector<1x1xf32>
    %16 = vector.broadcast %15 : vector<1x1xf32> to vector<3x1xf32>
    %17 = arith.subf %13, %16 : vector<3x1xf32>
    %18 = math.exp %17 : vector<3x1xf32>
    %cst_12 = arith.constant dense<0.000000e+00> : vector<1xf32>
    %19 = vector.multi_reduction <add>, %18, %cst_12 [0] : vector<3x1xf32> to vector<1xf32>
    %20 = vector.shape_cast %19 : vector<1xf32> to vector<1x1xf32>
    %21 = math.log %20 : vector<1x1xf32>
    %22 = vector.broadcast %21 : vector<1x1xf32> to vector<3x1xf32>
    %23 = arith.subf %17, %22 : vector<3x1xf32>
    %c0_13 = arith.constant 0 : index
    %c0_14 = arith.constant 0 : index
    %24 = vector.load %arg5[%c0_13, %c0_14] : memref<3x1xf32, #tpu.memory_space<vmem>>, vector<3x1xf32>
    tpu.vector_store %arg5[%c0_13, %c0_14], %23 {strides = array<i32>} : memref<3x1xf32, #tpu.memory_space<vmem>>, vector<3x1xf32>,
    %25 = vector.broadcast %23 : vector<3x1xf32> to vector<3x32xf32>
    %26 = arith.mulf %25, %0 : vector<3x32xf32>
    %cst_15 = arith.constant dense<0.000000e+00> : vector<32xf32>
    %27 = vector.multi_reduction <add>, %26, %cst_15 [0] : vector<3x32xf32> to vector<32xf32>
    %28 = vector.shape_cast %27 : vector<32xf32> to vector<1x32xf32>
    %c0_16 = arith.constant 0 : index
    %c0_17 = arith.constant 0 : index
    %29 = vector.load %arg6[%c0_16, %c0_17] : memref<1x32xf32, #tpu.memory_space<vmem>>, vector<1x32xf32>
    tpu.vector_store %arg6[%c0_16, %c0_17], %28 {strides = array<i32>} : memref<1x32xf32, #tpu.memory_space<vmem>>, vector<1x32xf32>,
    return
  }
}

</mosaic_0001>

<llo_original>
// kernel: tpu_custom_call.1
$region0: #{tpu_custom_call.1}
  #allocation0 [shape = 'u32[]', space=smem, size = 0x4, offset = 0x4, fixed_abs, tag = 'smem constant byte address 0x4 - core index']
  #allocation1 [shape = 'u32[144,128]{1,0:T(1,128)}', space=vmem, size = 0x12000, scoped, tag = 'internal scratch']
  %s0 = inlined_call_operand.hbm [shape: f32[3,32], index: 0, kind: input, shape index: {}]
  %s1 = inlined_call_operand.vmem [shape: f32[1,32], index: 1, kind: input, shape index: {}]
  %s2 = inlined_call_operand.hbm [shape: f32[32,32], index: 2, kind: input, shape index: {}]
  %s3 = inlined_call_operand.hbm [shape: f32[32,32], index: 3, kind: input, shape index: {}]
  %s4 = inlined_call_operand.vmem [shape: f32[1,32], index: 4, kind: input, shape index: {}]
  %s5 = inlined_call_operand.vmem [shape: f32[3,1], index: 5, kind: output, shape index: {0}]
  %s6 = inlined_call_operand.hbm [shape: f32[1,32], index: 6, kind: output, shape index: {1}]
  %7 = xla_tuple %s5, %s6
  %s8 = sld [smem:[#allocation0]]
  $region50: #{tpu_custom_call.1} parent=0
    _
  %s10 = ssub.s32 1, %s8
  %s11 = scalar_select 0, %s10, %s8
  $region1: #{tpu_custom_call.1} parent=0
    #allocation2 [shape = 'u8[2048]{0}', space=vmem, size = 0x800, scoped, tag = 'input window, operand 0, single buffered']
    #allocation3 [shape = 's32[1]{0}', space=sflag, size = 0x4, scoped, tag = 'scoped memory for tpu_custom_call.1']
    #allocation4 [shape = 's32[1]{0}', space=sflag, size = 0x4, scoped, tag = 'scoped memory for tpu_custom_call.1']
    #allocation5 [shape = 'u8[16384]{0}', space=vmem, size = 0x4000, scoped, tag = 'input window, operand 2, single buffered']
    #allocation6 [shape = 's32[1]{0}', space=sflag, size = 0x4, scoped, tag = 'scoped memory for tpu_custom_call.1']
    #allocation7 [shape = 'u8[16384]{0}', space=vmem, size = 0x4000, scoped, tag = 'input window, operand 3, single buffered']
    #allocation8 [shape = 'u8[512]{0}', space=vmem, size = 0x400, scoped, tag = 'output window, operand 1, single buffered']
    %12 = vsyncpa [#allocation3], 0
    %13 = vsyncpa [#allocation6], 0
    %14 = vsyncpa [#allocation4], 0
    // Predicated region
    $region2: #{tpu_custom_call.1} parent=1 // pred_check
      _
    $region3: #{tpu_custom_call.1} parent=1 // pred_check_branch
      %16 = sbr.rel (0) target = $region5
    $region4: #{tpu_custom_call.1} parent=1 // pred_region
      %s18 = ssub.s32 64, 64
      %19 = vsyncadd [#allocation3], %s18
      %s21 = sshll.u32 [#allocation2], 4
      %s22 = int_to_ptr.vmem [resolvable:$true] %s21
      %24 = dma.hbm_to_vmem [thread:$0]  %s0, 64, %s22, [#allocation3]
    $region5: #{tpu_custom_call.1} parent=1 // pred_fallthru
      _
    // Predicated region
    $region6: #{tpu_custom_call.1} parent=1 // pred_check
      _
    $region7: #{tpu_custom_call.1} parent=1 // pred_check_branch
      %26 = sbr.rel (0) target = $region9
    $region8: #{tpu_custom_call.1} parent=1 // pred_region
      _
    $region9: #{tpu_custom_call.1} parent=1 // pred_fallthru
      _
    // Predicated region
    $region10: #{tpu_custom_call.1} parent=1 // pred_check
      _
    $region11: #{tpu_custom_call.1} parent=1 // pred_check_branch
      %28 = sbr.rel (0) target = $region13
    $region12: #{tpu_custom_call.1} parent=1 // pred_region
      %s30 = ssub.s32 512, 512
      %31 = vsyncadd [#allocation6], %s30
      %s32 = sshll.u32 [#allocation5], 4
      %s33 = int_to_ptr.vmem [resolvable:$true] %s32
      %38 = dma.hbm_to_vmem [thread:$0]  %s2, 512, %s33, [#allocation6], 128, 128, 8
    $region13: #{tpu_custom_call.1} parent=1 // pred_fallthru
      _
    // Predicated region
    $region14: #{tpu_custom_call.1} parent=1 // pred_check
      _
    $region15: #{tpu_custom_call.1} parent=1 // pred_check_branch
      %40 = sbr.rel (0) target = $region17
    $region16: #{tpu_custom_call.1} parent=1 // pred_region
      %s42 = ssub.s32 512, 512
      %43 = vsyncadd [#allocation6], %s42
      %s44 = sshll.u32 [#allocation7], 4
      %s45 = int_to_ptr.vmem [resolvable:$true] %s44
      %50 = dma.hbm_to_vmem [thread:$0]  %s3, 512, %s45, [#allocation6], 128, 128, 8
    $region17: #{tpu_custom_call.1} parent=1 // pred_fallthru
      _
    // Predicated region
    $region18: #{tpu_custom_call.1} parent=1 // pred_check
      _
    $region19: #{tpu_custom_call.1} parent=1 // pred_check_branch
      %52 = sbr.rel (0) target = $region21
    $region20: #{tpu_custom_call.1} parent=1 // pred_region
      _
    $region21: #{tpu_custom_call.1} parent=1 // pred_fallthru
      _
    // Predicated region
    $region22: #{tpu_custom_call.1} parent=1 // pred_check
      _
    $region23: #{tpu_custom_call.1} parent=1 // pred_check_branch
      %54 = sbr.rel (0) target = $region25
    $region24: #{tpu_custom_call.1} parent=1 // pred_region
      %55 = dma.done [#allocation3], 64
    $region25: #{tpu_custom_call.1} parent=1 // pred_fallthru
      _
    // Predicated region
    $region26: #{tpu_custom_call.1} parent=1 // pred_check
      _
    $region27: #{tpu_custom_call.1} parent=1 // pred_check_branch
      %57 = sbr.rel (0) target = $region29
    $region28: #{tpu_custom_call.1} parent=1 // pred_region
      %58 = dma.done [#allocation6], 512
    $region29: #{tpu_custom_call.1} parent=1 // pred_fallthru
      _
    // Predicated region
    $region30: #{tpu_custom_call.1} parent=1 // pred_check
      _
    $region31: #{tpu_custom_call.1} parent=1 // pred_check_branch
      %60 = sbr.rel (0) target = $region33
    $region32: #{tpu_custom_call.1} parent=1 // pred_region
      %61 = dma.done [#allocation6], 512
    $region33: #{tpu_custom_call.1} parent=1 // pred_fallthru
      _
    %v62 = vld [vmem:[#allocation2] sm:$0x7]
    %v63 = vld [vmem:[%s1] sm:$0x1]
    %v64 = vld [vmem:[#allocation7] sm:$0xff]
    %v65 = vld [vmem:[#allocation7 + $0x8] sm:$0xff]
    %v66 = vld [vmem:[#allocation7 + $0x10] sm:$0xff]
    %v67 = vld [vmem:[#allocation7 + $0x18] sm:$0xff]
    %vm68 = vcmask 261120
    %v70 = vsel %vm68, %v63, 0
    %72 = vmatprep.subr.mxu0 0.0
    %73 = vmatpush1.msra.mxu0 0.0
    %74 = vmatprep.subr.mxu0 0.0
    %75 = vmatpush1.msra.mxu0 0.0
    %76 = vmatprep.subr.mxu0 0.0
    %77 = vmatpush1.msra.mxu0 0.0
    %78 = vmatprep.subr.mxu0 0.0
    %79 = vmatpush1.msra.mxu0 0.0
    %80 = vmatprep.subr.mxu0 0.0
    %81 = vmatpush1.msra.mxu0 0.0
    %82 = vmatprep.subr.mxu0 0.0
    %83 = vmatpush1.msra.mxu0 0.0
    %84 = vmatprep.subr.mxu0 0.0
    %85 = vmatpush1.msra.mxu0 0.0
    %86 = vmatprep.subr.mxu0 0.0
    %87 = vmatpush1.msra.mxu0 0.0
    %88 = vmatprep.subr.mxu0 0.0
    %89 = vmatpush1.msra.mxu0 0.0
    %90 = vmatprep.subr.mxu0 0.0
    %91 = vmatpush1.msra.mxu0 0.0
    %92 = vmatprep.subr.mxu0 0.0
    %93 = vmatpush1.msra.mxu0 0.0
    %94 = vmatprep.subr.mxu0 0.0
    %95 = vmatpush1.msra.mxu0 0.0
    %96 = vmatprep.subr.mxu0 0.0
    %v97 = vand.u32 %v67, 4294901760
    %98 = vmatpush1.msra.mxu0 %v97
    %99 = vmatprep.subr.mxu0 0.0
    %v100 = vand.u32 %v66, 4294901760
    %101 = vmatpush1.msra.mxu0 %v100
    %102 = vmatprep.subr.mxu0 0.0
    %v103 = vand.u32 %v65, 4294901760
    %104 = vmatpush1.msra.mxu0 %v103
    %105 = vmatprep.subr.mxu0 0.0
    %v106 = vand.u32 %v64, 4294901760
    %107 = vmatpush1.msra.mxu0 %v106
    %108 = vmatprep.subr.mxu0 0.0
    %109 = vmatpush2.msra.mxu0 0.0
    %110 = vmatprep.subr.mxu0 0.0
    %111 = vmatpush2.msra.mxu0 0.0
    %112 = vmatprep.subr.mxu0 0.0
    %113 = vmatpush2.msra.mxu0 0.0
    %114 = vmatprep.subr.mxu0 0.0
    %115 = vmatpush2.msra.mxu0 0.0
    %116 = vmatprep.subr.mxu0 0.0
    %117 = vmatpush2.msra.mxu0 0.0
    %118 = vmatprep.subr.mxu0 0.0
    %119 = vmatpush2.msra.mxu0 0.0
    %120 = vmatprep.subr.mxu0 0.0
    %121 = vmatpush2.msra.mxu0 0.0
    %122 = vmatprep.subr.mxu0 0.0
    %123 = vmatpush2.msra.mxu0 0.0
    %124 = vmatprep.subr.mxu0 0.0
    %125 = vmatpush2.msra.mxu0 0.0
    %126 = vmatprep.subr.mxu0 0.0
    %127 = vmatpush2.msra.mxu0 0.0
    %128 = vmatprep.subr.mxu0 0.0
    %129 = vmatpush2.msra.mxu0 0.0
    %130 = vmatprep.subr.mxu0 0.0
    %131 = vmatpush2.msra.mxu0 0.0
    %132 = vmatprep.subr.mxu0 0.0
    %133 = vmatpush2.msra.mxu0 0.0
    %134 = vmatprep.subr.mxu0 0.0
    %135 = vmatpush2.msra.mxu0 0.0
    %136 = vmatprep.subr.mxu0 0.0
    %137 = vmatpush2.msra.mxu0 0.0
    %138 = vmatprep.subr.mxu0 0.0
    %139 = vmatpush2.msra.mxu0 0.0
    %140 = vmatprep.mubr.f32.mxu0 0.0
    %v141 = vand.u32 %v70, 4294901760
    %v142 = vsub.f32 %v70, %v141
    %v143 = vand.u32 %v142, 4294901760
    %v144 = vsub.f32 %v142, %v143
    %v145 = vand.u32 %v144, 4294901760
    %146 = vmatmul.mubr.f32.gmra.mxu0 %v145
    %v147 = vpop.f32.mrf.mxu0
    %v148 = vadd.f32 0.0, %v147
    %v149 = vpop.f32.mrf.mxu0
    %150 = vdwg.mxu0
    %151 = vmatprep.subr.mxu0 0.0
    %152 = vmatpush1.msra.mxu0 0.0
    %153 = vmatprep.subr.mxu0 0.0
    %154 = vmatpush1.msra.mxu0 0.0
    %155 = vmatprep.subr.mxu0 0.0
    %156 = vmatpush1.msra.mxu0 0.0
    %157 = vmatprep.subr.mxu0 0.0
    %158 = vmatpush1.msra.mxu0 0.0
    %159 = vmatprep.subr.mxu0 0.0
    %160 = vmatpush1.msra.mxu0 0.0
    %161 = vmatprep.subr.mxu0 0.0
    %162 = vmatpush1.msra.mxu0 0.0
    %163 = vmatprep.subr.mxu0 0.0
    %164 = vmatpush1.msra.mxu0 0.0
    %165 = vmatprep.subr.mxu0 0.0
    %166 = vmatpush1.msra.mxu0 0.0
    %167 = vmatprep.subr.mxu0 0.0
    %168 = vmatpush1.msra.mxu0 0.0
    %169 = vmatprep.subr.mxu0 0.0
    %170 = vmatpush1.msra.mxu0 0.0
    %171 = vmatprep.subr.mxu0 0.0
    %172 = vmatpush1.msra.mxu0 0.0
    %173 = vmatprep.subr.mxu0 0.0
    %174 = vmatpush1.msra.mxu0 0.0
    %175 = vmatprep.subr.mxu0 0.0
    %v176 = vand.u32 %v67, 4294901760
    %v177 = vsub.f32 %v67, %v176
    %v178 = vand.u32 %v177, 4294901760
    %v179 = vsub.f32 %v177, %v178
    %v180 = vand.u32 %v179, 4294901760
    %181 = vmatpush1.msra.mxu0 %v180
    %182 = vmatprep.subr.mxu0 0.0
    %v183 = vand.u32 %v66, 4294901760
    %v184 = vsub.f32 %v66, %v183
    %v185 = vand.u32 %v184, 4294901760
    %v186 = vsub.f32 %v184, %v185
    %v187 = vand.u32 %v186, 4294901760
    %188 = vmatpush1.msra.mxu0 %v187
    %189 = vmatprep.subr.mxu0 0.0
    %v190 = vand.u32 %v65, 4294901760
    %v191 = vsub.f32 %v65, %v190
    %v192 = vand.u32 %v191, 4294901760
    %v193 = vsub.f32 %v191, %v192
    %v194 = vand.u32 %v193, 4294901760
    %195 = vmatpush1.msra.mxu0 %v194
    %196 = vmatprep.subr.mxu0 0.0
    %v197 = vand.u32 %v64, 4294901760
    %v198 = vsub.f32 %v64, %v197
    %v199 = vand.u32 %v198, 4294901760
    %v200 = vsub.f32 %v198, %v199
    %v201 = vand.u32 %v200, 4294901760
    %202 = vmatpush1.msra.mxu0 %v201
    %203 = vmatprep.subr.mxu0 0.0
    %204 = vmatpush2.msra.mxu0 0.0
    %205 = vmatprep.subr.mxu0 0.0
    %206 = vmatpush2.msra.mxu0 0.0
    %207 = vmatprep.subr.mxu0 0.0
    %208 = vmatpush2.msra.mxu0 0.0
    %209 = vmatprep.subr.mxu0 0.0
    %210 = vmatpush2.msra.mxu0 0.0
    %211 = vmatprep.subr.mxu0 0.0
    %212 = vmatpush2.msra.mxu0 0.0
    %213 = vmatprep.subr.mxu0 0.0
    %214 = vmatpush2.msra.mxu0 0.0
    %215 = vmatprep.subr.mxu0 0.0
    %216 = vmatpush2.msra.mxu0 0.0
    %217 = vmatprep.subr.mxu0 0.0
    %218 = vmatpush2.msra.mxu0 0.0
    %219 = vmatprep.subr.mxu0 0.0
    %220 = vmatpush2.msra.mxu0 0.0
    %221 = vmatprep.subr.mxu0 0.0
    %222 = vmatpush2.msra.mxu0 0.0
    %223 = vmatprep.subr.mxu0 0.0
    %224 = vmatpush2.msra.mxu0 0.0
    %225 = vmatprep.subr.mxu0 0.0
    %226 = vmatpush2.msra.mxu0 0.0
    %227 = vmatprep.subr.mxu0 0.0
    %228 = vmatpush2.msra.mxu0 0.0
    %229 = vmatprep.subr.mxu0 0.0
    %230 = vmatpush2.msra.mxu0 0.0
    %231 = vmatprep.subr.mxu0 0.0
    %232 = vmatpush2.msra.mxu0 0.0
    %233 = vmatprep.subr.mxu0 0.0
    %234 = vmatpush2.msra.mxu0 0.0
    %235 = vmatprep.mubr.f32.mxu0 0.0
    %v236 = vand.u32 %v70, 4294901760
    %237 = vmatmul.mubr.f32.gmra.mxu0 %v236
    %v238 = vpop.f32.mrf.mxu0
    %v239 = vadd.f32 %v148, %v238
    %v240 = vpop.f32.mrf.mxu0
    %241 = vdwg.mxu0
    %242 = vmatprep.subr.mxu0 0.0
    %243 = vmatpush1.msra.mxu0 0.0
    %244 = vmatprep.subr.mxu0 0.0
    %245 = vmatpush1.msra.mxu0 0.0
    %246 = vmatprep.subr.mxu0 0.0
    %247 = vmatpush1.msra.mxu0 0.0
    %248 = vmatprep.subr.mxu0 0.0
    %249 = vmatpush1.msra.mxu0 0.0
    %250 = vmatprep.subr.mxu0 0.0
    %251 = vmatpush1.msra.mxu0 0.0
    %252 = vmatprep.subr.mxu0 0.0
    %253 = vmatpush1.msra.mxu0 0.0
    %254 = vmatprep.subr.mxu0 0.0
    %255 = vmatpush1.msra.mxu0 0.0
    %256 = vmatprep.subr.mxu0 0.0
    %257 = vmatpush1.msra.mxu0 0.0
    %258 = vmatprep.subr.mxu0 0.0
    %259 = vmatpush1.msra.mxu0 0.0
    %260 = vmatprep.subr.mxu0 0.0
    %261 = vmatpush1.msra.mxu0 0.0
    %262 = vmatprep.subr.mxu0 0.0
    %263 = vmatpush1.msra.mxu0 0.0
    %264 = vmatprep.subr.mxu0 0.0
    %265 = vmatpush1.msra.mxu0 0.0
    %266 = vmatprep.subr.mxu0 0.0
    %v267 = vand.u32 %v67, 4294901760
    %v268 = vsub.f32 %v67, %v267
    %269 = vmatpush1.msra.mxu0 %v268
    %270 = vmatprep.subr.mxu0 0.0
    %v271 = vand.u32 %v66, 4294901760
    %v272 = vsub.f32 %v66, %v271
    %273 = vmatpush1.msra.mxu0 %v272
    %274 = vmatprep.subr.mxu0 0.0
    %v275 = vand.u32 %v65, 4294901760
    %v276 = vsub.f32 %v65, %v275
    %277 = vmatpush1.msra.mxu0 %v276
    %278 = vmatprep.subr.mxu0 0.0
    %v279 = vand.u32 %v64, 4294901760
    %v280 = vsub.f32 %v64, %v279
    %281 = vmatpush1.msra.mxu0 %v280
    %282 = vmatprep.subr.mxu0 0.0
    %283 = vmatpush2.msra.mxu0 0.0
    %284 = vmatprep.subr.mxu0 0.0
    %285 = vmatpush2.msra.mxu0 0.0
    %286 = vmatprep.subr.mxu0 0.0
    %287 = vmatpush2.msra.mxu0 0.0
    %288 = vmatprep.subr.mxu0 0.0
    %289 = vmatpush2.msra.mxu0 0.0
    %290 = vmatprep.subr.mxu0 0.0
    %291 = vmatpush2.msra.mxu0 0.0
    %292 = vmatprep.subr.mxu0 0.0
    %293 = vmatpush2.msra.mxu0 0.0
    %294 = vmatprep.subr.mxu0 0.0
    %295 = vmatpush2.msra.mxu0 0.0
    %296 = vmatprep.subr.mxu0 0.0
    %297 = vmatpush2.msra.mxu0 0.0
    %298 = vmatprep.subr.mxu0 0.0
    %299 = vmatpush2.msra.mxu0 0.0
    %300 = vmatprep.subr.mxu0 0.0
    %301 = vmatpush2.msra.mxu0 0.0
    %302 = vmatprep.subr.mxu0 0.0
    %303 = vmatpush2.msra.mxu0 0.0
    %304 = vmatprep.subr.mxu0 0.0
    %305 = vmatpush2.msra.mxu0 0.0
    %306 = vmatprep.subr.mxu0 0.0
    %307 = vmatpush2.msra.mxu0 0.0
    %308 = vmatprep.subr.mxu0 0.0
    %309 = vmatpush2.msra.mxu0 0.0
    %310 = vmatprep.subr.mxu0 0.0
    %311 = vmatpush2.msra.mxu0 0.0
    %312 = vmatprep.subr.mxu0 0.0
    %313 = vmatpush2.msra.mxu0 0.0
    %314 = vmatprep.mubr.f32.mxu0 0.0
    %v315 = vand.u32 %v70, 4294901760
    %v316 = vsub.f32 %v70, %v315
    %317 = vmatmul.mubr.f32.gmra.mxu0 %v316
    %v318 = vpop.f32.mrf.mxu0
    %v319 = vadd.f32 %v239, %v318
    %v320 = vpop.f32.mrf.mxu0
    %321 = vdwg.mxu0
    %322 = vmatprep.subr.mxu0 0.0
    %323 = vmatpush1.msra.mxu0 0.0
    %324 = vmatprep.subr.mxu0 0.0
    %325 = vmatpush1.msra.mxu0 0.0
    %326 = vmatprep.subr.mxu0 0.0
    %327 = vmatpush1.msra.mxu0 0.0
    %328 = vmatprep.subr.mxu0 0.0
    %329 = vmatpush1.msra.mxu0 0.0
    %330 = vmatprep.subr.mxu0 0.0
    %331 = vmatpush1.msra.mxu0 0.0
    %332 = vmatprep.subr.mxu0 0.0
    %333 = vmatpush1.msra.mxu0 0.0
    %334 = vmatprep.subr.mxu0 0.0
    %335 = vmatpush1.msra.mxu0 0.0
    %336 = vmatprep.subr.mxu0 0.0
    %337 = vmatpush1.msra.mxu0 0.0
    %338 = vmatprep.subr.mxu0 0.0
    %339 = vmatpush1.msra.mxu0 0.0
    %340 = vmatprep.subr.mxu0 0.0
    %341 = vmatpush1.msra.mxu0 0.0
    %342 = vmatprep.subr.mxu0 0.0
    %343 = vmatpush1.msra.mxu0 0.0
    %344 = vmatprep.subr.mxu0 0.0
    %345 = vmatpush1.msra.mxu0 0.0
    %346 = vmatprep.subr.mxu0 0.0
    %v347 = vand.u32 %v67, 4294901760
    %348 = vmatpush1.msra.mxu0 %v347
    %349 = vmatprep.subr.mxu0 0.0
    %v350 = vand.u32 %v66, 4294901760
    %351 = vmatpush1.msra.mxu0 %v350
    %352 = vmatprep.subr.mxu0 0.0
    %v353 = vand.u32 %v65, 4294901760
    %354 = vmatpush1.msra.mxu0 %v353
    %355 = vmatprep.subr.mxu0 0.0
    %v356 = vand.u32 %v64, 4294901760
    %357 = vmatpush1.msra.mxu0 %v356
    %358 = vmatprep.subr.mxu0 0.0
    %359 = vmatpush2.msra.mxu0 0.0
    %360 = vmatprep.subr.mxu0 0.0
    %361 = vmatpush2.msra.mxu0 0.0
    %362 = vmatprep.subr.mxu0 0.0
    %363 = vmatpush2.msra.mxu0 0.0
    %364 = vmatprep.subr.mxu0 0.0
    %365 = vmatpush2.msra.mxu0 0.0
    %366 = vmatprep.subr.mxu0 0.0
    %367 = vmatpush2.msra.mxu0 0.0
    %368 = vmatprep.subr.mxu0 0.0
    %369 = vmatpush2.msra.mxu0 0.0
    %370 = vmatprep.subr.mxu0 0.0
    %371 = vmatpush2.msra.mxu0 0.0
    %372 = vmatprep.subr.mxu0 0.0
    %373 = vmatpush2.msra.mxu0 0.0
    %374 = vmatprep.subr.mxu0 0.0
    %375 = vmatpush2.msra.mxu0 0.0
    %376 = vmatprep.subr.mxu0 0.0
    %377 = vmatpush2.msra.mxu0 0.0
    %378 = vmatprep.subr.mxu0 0.0
    %379 = vmatpush2.msra.mxu0 0.0
    %380 = vmatprep.subr.mxu0 0.0
    %381 = vmatpush2.msra.mxu0 0.0
    %382 = vmatprep.subr.mxu0 0.0
    %383 = vmatpush2.msra.mxu0 0.0
    %384 = vmatprep.subr.mxu0 0.0
    %385 = vmatpush2.msra.mxu0 0.0
    %386 = vmatprep.subr.mxu0 0.0
    %387 = vmatpush2.msra.mxu0 0.0
    %388 = vmatprep.subr.mxu0 0.0
    %389 = vmatpush2.msra.mxu0 0.0
    %390 = vmatprep.mubr.f32.mxu0 0.0
    %v391 = vand.u32 %v70, 4294901760
    %v392 = vsub.f32 %v70, %v391
    %v393 = vand.u32 %v392, 4294901760
    %394 = vmatmul.mubr.f32.gmra.mxu0 %v393
    %v395 = vpop.f32.mrf.mxu0
    %v396 = vadd.f32 %v319, %v395
    %v397 = vpop.f32.mrf.mxu0
    %398 = vdwg.mxu0
    %399 = vmatprep.subr.mxu0 0.0
    %400 = vmatpush1.msra.mxu0 0.0
    %401 = vmatprep.subr.mxu0 0.0
    %402 = vmatpush1.msra.mxu0 0.0
    %403 = vmatprep.subr.mxu0 0.0
    %404 = vmatpush1.msra.mxu0 0.0
    %405 = vmatprep.subr.mxu0 0.0
    %406 = vmatpush1.msra.mxu0 0.0
    %407 = vmatprep.subr.mxu0 0.0
    %408 = vmatpush1.msra.mxu0 0.0
    %409 = vmatprep.subr.mxu0 0.0
    %410 = vmatpush1.msra.mxu0 0.0
    %411 = vmatprep.subr.mxu0 0.0
    %412 = vmatpush1.msra.mxu0 0.0
    %413 = vmatprep.subr.mxu0 0.0
    %414 = vmatpush1.msra.mxu0 0.0
    %415 = vmatprep.subr.mxu0 0.0
    %416 = vmatpush1.msra.mxu0 0.0
    %417 = vmatprep.subr.mxu0 0.0
    %418 = vmatpush1.msra.mxu0 0.0
    %419 = vmatprep.subr.mxu0 0.0
    %420 = vmatpush1.msra.mxu0 0.0
    %421 = vmatprep.subr.mxu0 0.0
    %422 = vmatpush1.msra.mxu0 0.0
    %423 = vmatprep.subr.mxu0 0.0
    %v424 = vand.u32 %v67, 4294901760
    %v425 = vsub.f32 %v67, %v424
    %v426 = vand.u32 %v425, 4294901760
    %427 = vmatpush1.msra.mxu0 %v426
    %428 = vmatprep.subr.mxu0 0.0
    %v429 = vand.u32 %v66, 4294901760
    %v430 = vsub.f32 %v66, %v429
    %v431 = vand.u32 %v430, 4294901760
    %432 = vmatpush1.msra.mxu0 %v431
    %433 = vmatprep.subr.mxu0 0.0
    %v434 = vand.u32 %v65, 4294901760
    %v435 = vsub.f32 %v65, %v434
    %v436 = vand.u32 %v435, 4294901760
    %437 = vmatpush1.msra.mxu0 %v436
    %438 = vmatprep.subr.mxu0 0.0
    %v439 = vand.u32 %v64, 4294901760
    %v440 = vsub.f32 %v64, %v439
    %v441 = vand.u32 %v440, 4294901760
    %442 = vmatpush1.msra.mxu0 %v441
    %443 = vmatprep.subr.mxu0 0.0
    %444 = vmatpush2.msra.mxu0 0.0
    %445 = vmatprep.subr.mxu0 0.0
    %446 = vmatpush2.msra.mxu0 0.0
    %447 = vmatprep.subr.mxu0 0.0
    %448 = vmatpush2.msra.mxu0 0.0
    %449 = vmatprep.subr.mxu0 0.0
    %450 = vmatpush2.msra.mxu0 0.0
    %451 = vmatprep.subr.mxu0 0.0
    %452 = vmatpush2.msra.mxu0 0.0
    %453 = vmatprep.subr.mxu0 0.0
    %454 = vmatpush2.msra.mxu0 0.0
    %455 = vmatprep.subr.mxu0 0.0
    %456 = vmatpush2.msra.mxu0 0.0
    %457 = vmatprep.subr.mxu0 0.0
    %458 = vmatpush2.msra.mxu0 0.0
    %459 = vmatprep.subr.mxu0 0.0
    %460 = vmatpush2.msra.mxu0 0.0
    %461 = vmatprep.subr.mxu0 0.0
    %462 = vmatpush2.msra.mxu0 0.0
    %463 = vmatprep.subr.mxu0 0.0
    %464 = vmatpush2.msra.mxu0 0.0
    %465 = vmatprep.subr.mxu0 0.0
    %466 = vmatpush2.msra.mxu0 0.0
    %467 = vmatprep.subr.mxu0 0.0
    %468 = vmatpush2.msra.mxu0 0.0
    %469 = vmatprep.subr.mxu0 0.0
    %470 = vmatpush2.msra.mxu0 0.0
    %471 = vmatprep.subr.mxu0 0.0
    %472 = vmatpush2.msra.mxu0 0.0
    %473 = vmatprep.subr.mxu0 0.0
    %474 = vmatpush2.msra.mxu0 0.0
    %475 = vmatprep.mubr.f32.mxu0 0.0
    %v476 = vand.u32 %v70, 4294901760
    %477 = vmatmul.mubr.f32.gmra.mxu0 %v476
    %v478 = vpop.f32.mrf.mxu0
    %v479 = vadd.f32 %v396, %v478
    %v480 = vpop.f32.mrf.mxu0
    %481 = vdwg.mxu0
    %482 = vmatprep.subr.mxu0 0.0
    %483 = vmatpush1.msra.mxu0 0.0
    %484 = vmatprep.subr.mxu0 0.0
    %485 = vmatpush1.msra.mxu0 0.0
    %486 = vmatprep.subr.mxu0 0.0
    %487 = vmatpush1.msra.mxu0 0.0
    %488 = vmatprep.subr.mxu0 0.0
    %489 = vmatpush1.msra.mxu0 0.0
    %490 = vmatprep.subr.mxu0 0.0
    %491 = vmatpush1.msra.mxu0 0.0
    %492 = vmatprep.subr.mxu0 0.0
    %493 = vmatpush1.msra.mxu0 0.0
    %494 = vmatprep.subr.mxu0 0.0
    %495 = vmatpush1.msra.mxu0 0.0
    %496 = vmatprep.subr.mxu0 0.0
    %497 = vmatpush1.msra.mxu0 0.0
    %498 = vmatprep.subr.mxu0 0.0
    %499 = vmatpush1.msra.mxu0 0.0
    %500 = vmatprep.subr.mxu0 0.0
    %501 = vmatpush1.msra.mxu0 0.0
    %502 = vmatprep.subr.mxu0 0.0
    %503 = vmatpush1.msra.mxu0 0.0
    %504 = vmatprep.subr.mxu0 0.0
    %505 = vmatpush1.msra.mxu0 0.0
    %506 = vmatprep.subr.mxu0 0.0
    %v507 = vand.u32 %v67, 4294901760
    %508 = vmatpush1.msra.mxu0 %v507
    %509 = vmatprep.subr.mxu0 0.0
    %v510 = vand.u32 %v66, 4294901760
    %511 = vmatpush1.msra.mxu0 %v510
    %512 = vmatprep.subr.mxu0 0.0
    %v513 = vand.u32 %v65, 4294901760
    %514 = vmatpush1.msra.mxu0 %v513
    %515 = vmatprep.subr.mxu0 0.0
    %v516 = vand.u32 %v64, 4294901760
    %517 = vmatpush1.msra.mxu0 %v516
    %518 = vmatprep.subr.mxu0 0.0
    %519 = vmatpush2.msra.mxu0 0.0
    %520 = vmatprep.subr.mxu0 0.0
    %521 = vmatpush2.msra.mxu0 0.0
    %522 = vmatprep.subr.mxu0 0.0
    %523 = vmatpush2.msra.mxu0 0.0
    %524 = vmatprep.subr.mxu0 0.0
    %525 = vmatpush2.msra.mxu0 0.0
    %526 = vmatprep.subr.mxu0 0.0
    %527 = vmatpush2.msra.mxu0 0.0
    %528 = vmatprep.subr.mxu0 0.0
    %529 = vmatpush2.msra.mxu0 0.0
    %530 = vmatprep.subr.mxu0 0.0
    %531 = vmatpush2.msra.mxu0 0.0
    %532 = vmatprep.subr.mxu0 0.0
    %533 = vmatpush2.msra.mxu0 0.0
    %534 = vmatprep.subr.mxu0 0.0
    %535 = vmatpush2.msra.mxu0 0.0
    %536 = vmatprep.subr.mxu0 0.0
    %537 = vmatpush2.msra.mxu0 0.0
    %538 = vmatprep.subr.mxu0 0.0
    %539 = vmatpush2.msra.mxu0 0.0
    %540 = vmatprep.subr.mxu0 0.0
    %541 = vmatpush2.msra.mxu0 0.0
    %542 = vmatprep.subr.mxu0 0.0
    %543 = vmatpush2.msra.mxu0 0.0
    %544 = vmatprep.subr.mxu0 0.0
    %545 = vmatpush2.msra.mxu0 0.0
    %546 = vmatprep.subr.mxu0 0.0
    %547 = vmatpush2.msra.mxu0 0.0
    %548 = vmatprep.subr.mxu0 0.0
    %549 = vmatpush2.msra.mxu0 0.0
    %550 = vmatprep.mubr.f32.mxu0 0.0
    %v551 = vand.u32 %v70, 4294901760
    %552 = vmatmul.mubr.f32.gmra.mxu0 %v551
    %v553 = vpop.f32.mrf.mxu0
    %v554 = vadd.f32 %v479, %v553
    %v555 = vpop.f32.mrf.mxu0
    %556 = vdwg.mxu0
    %v557 = vld [vmem:[#allocation5] sm:$0xff]
    %v558 = vld [vmem:[#allocation5 + $0x8] sm:$0xff]
    %v559 = vld [vmem:[#allocation5 + $0x10] sm:$0xff]
    %v560 = vld [vmem:[#allocation5 + $0x18] sm:$0xff]
    %v561 = vlaneseq
    %v562 = vshrl.u32 %v561, 7
    %v563 = vsub.s32 0, %v562
    %v564 = vrot.slane %v554, %v563
    %v566 = vsel %vm68, %v62, 0
    %568 = vmatprep.subr.mxu0 0.0
    %569 = vmatpush1.msra.mxu0 0.0
    %570 = vmatprep.subr.mxu0 0.0
    %571 = vmatpush1.msra.mxu0 0.0
    %572 = vmatprep.subr.mxu0 0.0
    %573 = vmatpush1.msra.mxu0 0.0
    %574 = vmatprep.subr.mxu0 0.0
    %575 = vmatpush1.msra.mxu0 0.0
    %576 = vmatprep.subr.mxu0 0.0
    %577 = vmatpush1.msra.mxu0 0.0
    %578 = vmatprep.subr.mxu0 0.0
    %579 = vmatpush1.msra.mxu0 0.0
    %580 = vmatprep.subr.mxu0 0.0
    %581 = vmatpush1.msra.mxu0 0.0
    %582 = vmatprep.subr.mxu0 0.0
    %583 = vmatpush1.msra.mxu0 0.0
    %584 = vmatprep.subr.mxu0 0.0
    %585 = vmatpush1.msra.mxu0 0.0
    %586 = vmatprep.subr.mxu0 0.0
    %587 = vmatpush1.msra.mxu0 0.0
    %588 = vmatprep.subr.mxu0 0.0
    %589 = vmatpush1.msra.mxu0 0.0
    %590 = vmatprep.subr.mxu0 0.0
    %591 = vmatpush1.msra.mxu0 0.0
    %592 = vmatprep.subr.mxu0 0.0
    %v593 = vand.u32 %v560, 4294901760
    %594 = vmatpush1.msra.mxu0 %v593
    %595 = vmatprep.subr.mxu0 0.0
    %v596 = vand.u32 %v559, 4294901760
    %597 = vmatpush1.msra.mxu0 %v596
    %598 = vmatprep.subr.mxu0 0.0
    %v599 = vand.u32 %v558, 4294901760
    %600 = vmatpush1.msra.mxu0 %v599
    %601 = vmatprep.subr.mxu0 0.0
    %v602 = vand.u32 %v557, 4294901760
    %603 = vmatpush1.msra.mxu0 %v602
    %604 = vmatprep.subr.mxu0 0.0
    %605 = vmatpush2.msra.mxu0 0.0
    %606 = vmatprep.subr.mxu0 0.0
    %607 = vmatpush2.msra.mxu0 0.0
    %608 = vmatprep.subr.mxu0 0.0
    %609 = vmatpush2.msra.mxu0 0.0
    %610 = vmatprep.subr.mxu0 0.0
    %611 = vmatpush2.msra.mxu0 0.0
    %612 = vmatprep.subr.mxu0 0.0
    %613 = vmatpush2.msra.mxu0 0.0
    %614 = vmatprep.subr.mxu0 0.0
    %615 = vmatpush2.msra.mxu0 0.0
    %616 = vmatprep.subr.mxu0 0.0
    %617 = vmatpush2.msra.mxu0 0.0
    %618 = vmatprep.subr.mxu0 0.0
    %619 = vmatpush2.msra.mxu0 0.0
    %620 = vmatprep.subr.mxu0 0.0
    %621 = vmatpush2.msra.mxu0 0.0
    %622 = vmatprep.subr.mxu0 0.0
    %623 = vmatpush2.msra.mxu0 0.0
    %624 = vmatprep.subr.mxu0 0.0
    %625 = vmatpush2.msra.mxu0 0.0
    %626 = vmatprep.subr.mxu0 0.0
    %627 = vmatpush2.msra.mxu0 0.0
    %628 = vmatprep.subr.mxu0 0.0
    %629 = vmatpush2.msra.mxu0 0.0
    %630 = vmatprep.subr.mxu0 0.0
    %631 = vmatpush2.msra.mxu0 0.0
    %632 = vmatprep.subr.mxu0 0.0
    %633 = vmatpush2.msra.mxu0 0.0
    %634 = vmatprep.subr.mxu0 0.0
    %635 = vmatpush2.msra.mxu0 0.0
    %636 = vmatprep.mubr.f32.mxu0 0.0
    %v637 = vand.u32 %v566, 4294901760
    %v638 = vsub.f32 %v566, %v637
    %v639 = vand.u32 %v638, 4294901760
    %v640 = vsub.f32 %v638, %v639
    %v641 = vand.u32 %v640, 4294901760
    %642 = vmatmul.mubr.f32.gmra.mxu0 %v641
    %v643 = vpop.f32.mrf.mxu0
    %v644 = vadd.f32 %v564, %v643
    %v645 = vpop.f32.mrf.mxu0
    %646 = vdwg.mxu0
    %647 = vmatprep.subr.mxu0 0.0
    %648 = vmatpush1.msra.mxu0 0.0
    %649 = vmatprep.subr.mxu0 0.0
    %650 = vmatpush1.msra.mxu0 0.0
    %651 = vmatprep.subr.mxu0 0.0
    %652 = vmatpush1.msra.mxu0 0.0
    %653 = vmatprep.subr.mxu0 0.0
    %654 = vmatpush1.msra.mxu0 0.0
    %655 = vmatprep.subr.mxu0 0.0
    %656 = vmatpush1.msra.mxu0 0.0
    %657 = vmatprep.subr.mxu0 0.0
    %658 = vmatpush1.msra.mxu0 0.0
    %659 = vmatprep.subr.mxu0 0.0
    %660 = vmatpush1.msra.mxu0 0.0
    %661 = vmatprep.subr.mxu0 0.0
    %662 = vmatpush1.msra.mxu0 0.0
    %663 = vmatprep.subr.mxu0 0.0
    %664 = vmatpush1.msra.mxu0 0.0
    %665 = vmatprep.subr.mxu0 0.0
    %666 = vmatpush1.msra.mxu0 0.0
    %667 = vmatprep.subr.mxu0 0.0
    %668 = vmatpush1.msra.mxu0 0.0
    %669 = vmatprep.subr.mxu0 0.0
    %670 = vmatpush1.msra.mxu0 0.0
    %671 = vmatprep.subr.mxu0 0.0
    %v672 = vand.u32 %v560, 4294901760
    %v673 = vsub.f32 %v560, %v672
    %v674 = vand.u32 %v673, 4294901760
    %v675 = vsub.f32 %v673, %v674
    %v676 = vand.u32 %v675, 4294901760
    %677 = vmatpush1.msra.mxu0 %v676
    %678 = vmatprep.subr.mxu0 0.0
    %v679 = vand.u32 %v559, 4294901760
    %v680 = vsub.f32 %v559, %v679
    %v681 = vand.u32 %v680, 4294901760
    %v682 = vsub.f32 %v680, %v681
    %v683 = vand.u32 %v682, 4294901760
    %684 = vmatpush1.msra.mxu0 %v683
    %685 = vmatprep.subr.mxu0 0.0
    %v686 = vand.u32 %v558, 4294901760
    %v687 = vsub.f32 %v558, %v686
    %v688 = vand.u32 %v687, 4294901760
    %v689 = vsub.f32 %v687, %v688
    %v690 = vand.u32 %v689, 4294901760
    %691 = vmatpush1.msra.mxu0 %v690
    %692 = vmatprep.subr.mxu0 0.0
    %v693 = vand.u32 %v557, 4294901760
    %v694 = vsub.f32 %v557, %v693
    %v695 = vand.u32 %v694, 4294901760
    %v696 = vsub.f32 %v694, %v695
    %v697 = vand.u32 %v696, 4294901760
    %698 = vmatpush1.msra.mxu0 %v697
    %699 = vmatprep.subr.mxu0 0.0
    %700 = vmatpush2.msra.mxu0 0.0
    %701 = vmatprep.subr.mxu0 0.0
    %702 = vmatpush2.msra.mxu0 0.0
    %703 = vmatprep.subr.mxu0 0.0
    %704 = vmatpush2.msra.mxu0 0.0
    %705 = vmatprep.subr.mxu0 0.0
    %706 = vmatpush2.msra.mxu0 0.0
    %707 = vmatprep.subr.mxu0 0.0
    %708 = vmatpush2.msra.mxu0 0.0
    %709 = vmatprep.subr.mxu0 0.0
    %710 = vmatpush2.msra.mxu0 0.0
    %711 = vmatprep.subr.mxu0 0.0
    %712 = vmatpush2.msra.mxu0 0.0
    %713 = vmatprep.subr.mxu0 0.0
    %714 = vmatpush2.msra.mxu0 0.0
    %715 = vmatprep.subr.mxu0 0.0
    %716 = vmatpush2.msra.mxu0 0.0
    %717 = vmatprep.subr.mxu0 0.0
    %718 = vmatpush2.msra.mxu0 0.0
    %719 = vmatprep.subr.mxu0 0.0
    %720 = vmatpush2.msra.mxu0 0.0
    %721 = vmatprep.subr.mxu0 0.0
    %722 = vmatpush2.msra.mxu0 0.0
    %723 = vmatprep.subr.mxu0 0.0
    %724 = vmatpush2.msra.mxu0 0.0
    %725 = vmatprep.subr.mxu0 0.0
    %726 = vmatpush2.msra.mxu0 0.0
    %727 = vmatprep.subr.mxu0 0.0
    %728 = vmatpush2.msra.mxu0 0.0
    %729 = vmatprep.subr.mxu0 0.0
    %730 = vmatpush2.msra.mxu0 0.0
    %731 = vmatprep.mubr.f32.mxu0 0.0
    %v732 = vand.u32 %v566, 4294901760
    %733 = vmatmul.mubr.f32.gmra.mxu0 %v732
    %v734 = vpop.f32.mrf.mxu0
    %v735 = vadd.f32 %v644, %v734
    %v736 = vpop.f32.mrf.mxu0
    %737 = vdwg.mxu0
    %738 = vmatprep.subr.mxu0 0.0
    %739 = vmatpush1.msra.mxu0 0.0
    %740 = vmatprep.subr.mxu0 0.0
    %741 = vmatpush1.msra.mxu0 0.0
    %742 = vmatprep.subr.mxu0 0.0
    %743 = vmatpush1.msra.mxu0 0.0
    %744 = vmatprep.subr.mxu0 0.0
    %745 = vmatpush1.msra.mxu0 0.0
    %746 = vmatprep.subr.mxu0 0.0
    %747 = vmatpush1.msra.mxu0 0.0
    %748 = vmatprep.subr.mxu0 0.0
    %749 = vmatpush1.msra.mxu0 0.0
    %750 = vmatprep.subr.mxu0 0.0
    %751 = vmatpush1.msra.mxu0 0.0
    %752 = vmatprep.subr.mxu0 0.0
    %753 = vmatpush1.msra.mxu0 0.0
    %754 = vmatprep.subr.mxu0 0.0
    %755 = vmatpush1.msra.mxu0 0.0
    %756 = vmatprep.subr.mxu0 0.0
    %757 = vmatpush1.msra.mxu0 0.0
    %758 = vmatprep.subr.mxu0 0.0
    %759 = vmatpush1.msra.mxu0 0.0
    %760 = vmatprep.subr.mxu0 0.0
    %761 = vmatpush1.msra.mxu0 0.0
    %762 = vmatprep.subr.mxu0 0.0
    %v763 = vand.u32 %v560, 4294901760
    %v764 = vsub.f32 %v560, %v763
    %765 = vmatpush1.msra.mxu0 %v764
    %766 = vmatprep.subr.mxu0 0.0
    %v767 = vand.u32 %v559, 4294901760
    %v768 = vsub.f32 %v559, %v767
    %769 = vmatpush1.msra.mxu0 %v768
    %770 = vmatprep.subr.mxu0 0.0
    %v771 = vand.u32 %v558, 4294901760
    %v772 = vsub.f32 %v558, %v771
    %773 = vmatpush1.msra.mxu0 %v772
    %774 = vmatprep.subr.mxu0 0.0
    %v775 = vand.u32 %v557, 4294901760
    %v776 = vsub.f32 %v557, %v775
    %777 = vmatpush1.msra.mxu0 %v776
    %778 = vmatprep.subr.mxu0 0.0
    %779 = vmatpush2.msra.mxu0 0.0
    %780 = vmatprep.subr.mxu0 0.0
    %781 = vmatpush2.msra.mxu0 0.0
    %782 = vmatprep.subr.mxu0 0.0
    %783 = vmatpush2.msra.mxu0 0.0
    %784 = vmatprep.subr.mxu0 0.0
    %785 = vmatpush2.msra.mxu0 0.0
    %786 = vmatprep.subr.mxu0 0.0
    %787 = vmatpush2.msra.mxu0 0.0
    %788 = vmatprep.subr.mxu0 0.0
    %789 = vmatpush2.msra.mxu0 0.0
    %790 = vmatprep.subr.mxu0 0.0
    %791 = vmatpush2.msra.mxu0 0.0
    %792 = vmatprep.subr.mxu0 0.0
    %793 = vmatpush2.msra.mxu0 0.0
    %794 = vmatprep.subr.mxu0 0.0
    %795 = vmatpush2.msra.mxu0 0.0
    %796 = vmatprep.subr.mxu0 0.0
    %797 = vmatpush2.msra.mxu0 0.0
    %798 = vmatprep.subr.mxu0 0.0
    %799 = vmatpush2.msra.mxu0 0.0
    %800 = vmatprep.subr.mxu0 0.0
    %801 = vmatpush2.msra.mxu0 0.0
    %802 = vmatprep.subr.mxu0 0.0
    %803 = vmatpush2.msra.mxu0 0.0
    %804 = vmatprep.subr.mxu0 0.0
    %805 = vmatpush2.msra.mxu0 0.0
    %806 = vmatprep.subr.mxu0 0.0
    %807 = vmatpush2.msra.mxu0 0.0
    %808 = vmatprep.subr.mxu0 0.0
    %809 = vmatpush2.msra.mxu0 0.0
    %810 = vmatprep.mubr.f32.mxu0 0.0
    %v811 = vand.u32 %v566, 4294901760
    %v812 = vsub.f32 %v566, %v811
    %813 = vmatmul.mubr.f32.gmra.mxu0 %v812
    %v814 = vpop.f32.mrf.mxu0
    %v815 = vadd.f32 %v735, %v814
    %v816 = vpop.f32.mrf.mxu0
    %817 = vdwg.mxu0
    %818 = vmatprep.subr.mxu0 0.0
    %819 = vmatpush1.msra.mxu0 0.0
    %820 = vmatprep.subr.mxu0 0.0
    %821 = vmatpush1.msra.mxu0 0.0
    %822 = vmatprep.subr.mxu0 0.0
    %823 = vmatpush1.msra.mxu0 0.0
    %824 = vmatprep.subr.mxu0 0.0
    %825 = vmatpush1.msra.mxu0 0.0
    %826 = vmatprep.subr.mxu0 0.0
    %827 = vmatpush1.msra.mxu0 0.0
    %828 = vmatprep.subr.mxu0 0.0
    %829 = vmatpush1.msra.mxu0 0.0
    %830 = vmatprep.subr.mxu0 0.0
    %831 = vmatpush1.msra.mxu0 0.0
    %832 = vmatprep.subr.mxu0 0.0
    %833 = vmatpush1.msra.mxu0 0.0
    %834 = vmatprep.subr.mxu0 0.0
    %835 = vmatpush1.msra.mxu0 0.0
    %836 = vmatprep.subr.mxu0 0.0
    %837 = vmatpush1.msra.mxu0 0.0
    %838 = vmatprep.subr.mxu0 0.0
    %839 = vmatpush1.msra.mxu0 0.0
    %840 = vmatprep.subr.mxu0 0.0
    %841 = vmatpush1.msra.mxu0 0.0
    %842 = vmatprep.subr.mxu0 0.0
    %v843 = vand.u32 %v560, 4294901760
    %844 = vmatpush1.msra.mxu0 %v843
    %845 = vmatprep.subr.mxu0 0.0
    %v846 = vand.u32 %v559, 4294901760
    %847 = vmatpush1.msra.mxu0 %v846
    %848 = vmatprep.subr.mxu0 0.0
    %v849 = vand.u32 %v558, 4294901760
    %850 = vmatpush1.msra.mxu0 %v849
    %851 = vmatprep.subr.mxu0 0.0
    %v852 = vand.u32 %v557, 4294901760
    %853 = vmatpush1.msra.mxu0 %v852
    %854 = vmatprep.subr.mxu0 0.0
    %855 = vmatpush2.msra.mxu0 0.0
    %856 = vmatprep.subr.mxu0 0.0
    %857 = vmatpush2.msra.mxu0 0.0
    %858 = vmatprep.subr.mxu0 0.0
    %859 = vmatpush2.msra.mxu0 0.0
    %860 = vmatprep.subr.mxu0 0.0
    %861 = vmatpush2.msra.mxu0 0.0
    %862 = vmatprep.subr.mxu0 0.0
    %863 = vmatpush2.msra.mxu0 0.0
    %864 = vmatprep.subr.mxu0 0.0
    %865 = vmatpush2.msra.mxu0 0.0
    %866 = vmatprep.subr.mxu0 0.0
    %867 = vmatpush2.msra.mxu0 0.0
    %868 = vmatprep.subr.mxu0 0.0
    %869 = vmatpush2.msra.mxu0 0.0
    %870 = vmatprep.subr.mxu0 0.0
    %871 = vmatpush2.msra.mxu0 0.0
    %872 = vmatprep.subr.mxu0 0.0
    %873 = vmatpush2.msra.mxu0 0.0
    %874 = vmatprep.subr.mxu0 0.0
    %875 = vmatpush2.msra.mxu0 0.0
    %876 = vmatprep.subr.mxu0 0.0
    %877 = vmatpush2.msra.mxu0 0.0
    %878 = vmatprep.subr.mxu0 0.0
    %879 = vmatpush2.msra.mxu0 0.0
    %880 = vmatprep.subr.mxu0 0.0
    %881 = vmatpush2.msra.mxu0 0.0
    %882 = vmatprep.subr.mxu0 0.0
    %883 = vmatpush2.msra.mxu0 0.0
    %884 = vmatprep.subr.mxu0 0.0
    %885 = vmatpush2.msra.mxu0 0.0
    %886 = vmatprep.mubr.f32.mxu0 0.0
    %v887 = vand.u32 %v566, 4294901760
    %v888 = vsub.f32 %v566, %v887
    %v889 = vand.u32 %v888, 4294901760
    %890 = vmatmul.mubr.f32.gmra.mxu0 %v889
    %v891 = vpop.f32.mrf.mxu0
    %v892 = vadd.f32 %v815, %v891
    %v893 = vpop.f32.mrf.mxu0
    %894 = vdwg.mxu0
    %895 = vmatprep.subr.mxu0 0.0
    %896 = vmatpush1.msra.mxu0 0.0
    %897 = vmatprep.subr.mxu0 0.0
    %898 = vmatpush1.msra.mxu0 0.0
    %899 = vmatprep.subr.mxu0 0.0
    %900 = vmatpush1.msra.mxu0 0.0
    %901 = vmatprep.subr.mxu0 0.0
    %902 = vmatpush1.msra.mxu0 0.0
    %903 = vmatprep.subr.mxu0 0.0
    %904 = vmatpush1.msra.mxu0 0.0
    %905 = vmatprep.subr.mxu0 0.0
    %906 = vmatpush1.msra.mxu0 0.0
    %907 = vmatprep.subr.mxu0 0.0
    %908 = vmatpush1.msra.mxu0 0.0
    %909 = vmatprep.subr.mxu0 0.0
    %910 = vmatpush1.msra.mxu0 0.0
    %911 = vmatprep.subr.mxu0 0.0
    %912 = vmatpush1.msra.mxu0 0.0
    %913 = vmatprep.subr.mxu0 0.0
    %914 = vmatpush1.msra.mxu0 0.0
    %915 = vmatprep.subr.mxu0 0.0
    %916 = vmatpush1.msra.mxu0 0.0
    %917 = vmatprep.subr.mxu0 0.0
    %918 = vmatpush1.msra.mxu0 0.0
    %919 = vmatprep.subr.mxu0 0.0
    %v920 = vand.u32 %v560, 4294901760
    %v921 = vsub.f32 %v560, %v920
    %v922 = vand.u32 %v921, 4294901760
    %923 = vmatpush1.msra.mxu0 %v922
    %924 = vmatprep.subr.mxu0 0.0
    %v925 = vand.u32 %v559, 4294901760
    %v926 = vsub.f32 %v559, %v925
    %v927 = vand.u32 %v926, 4294901760
    %928 = vmatpush1.msra.mxu0 %v927
    %929 = vmatprep.subr.mxu0 0.0
    %v930 = vand.u32 %v558, 4294901760
    %v931 = vsub.f32 %v558, %v930
    %v932 = vand.u32 %v931, 4294901760
    %933 = vmatpush1.msra.mxu0 %v932
    %934 = vmatprep.subr.mxu0 0.0
    %v935 = vand.u32 %v557, 4294901760
    %v936 = vsub.f32 %v557, %v935
    %v937 = vand.u32 %v936, 4294901760
    %938 = vmatpush1.msra.mxu0 %v937
    %939 = vmatprep.subr.mxu0 0.0
    %940 = vmatpush2.msra.mxu0 0.0
    %941 = vmatprep.subr.mxu0 0.0
    %942 = vmatpush2.msra.mxu0 0.0
    %943 = vmatprep.subr.mxu0 0.0
    %944 = vmatpush2.msra.mxu0 0.0
    %945 = vmatprep.subr.mxu0 0.0
    %946 = vmatpush2.msra.mxu0 0.0
    %947 = vmatprep.subr.mxu0 0.0
    %948 = vmatpush2.msra.mxu0 0.0
    %949 = vmatprep.subr.mxu0 0.0
    %950 = vmatpush2.msra.mxu0 0.0
    %951 = vmatprep.subr.mxu0 0.0
    %952 = vmatpush2.msra.mxu0 0.0
    %953 = vmatprep.subr.mxu0 0.0
    %954 = vmatpush2.msra.mxu0 0.0
    %955 = vmatprep.subr.mxu0 0.0
    %956 = vmatpush2.msra.mxu0 0.0
    %957 = vmatprep.subr.mxu0 0.0
    %958 = vmatpush2.msra.mxu0 0.0
    %959 = vmatprep.subr.mxu0 0.0
    %960 = vmatpush2.msra.mxu0 0.0
    %961 = vmatprep.subr.mxu0 0.0
    %962 = vmatpush2.msra.mxu0 0.0
    %963 = vmatprep.subr.mxu0 0.0
    %964 = vmatpush2.msra.mxu0 0.0
    %965 = vmatprep.subr.mxu0 0.0
    %966 = vmatpush2.msra.mxu0 0.0
    %967 = vmatprep.subr.mxu0 0.0
    %968 = vmatpush2.msra.mxu0 0.0
    %969 = vmatprep.subr.mxu0 0.0
    %970 = vmatpush2.msra.mxu0 0.0
    %971 = vmatprep.mubr.f32.mxu0 0.0
    %v972 = vand.u32 %v566, 4294901760
    %973 = vmatmul.mubr.f32.gmra.mxu0 %v972
    %v974 = vpop.f32.mrf.mxu0
    %v975 = vadd.f32 %v892, %v974
    %v976 = vpop.f32.mrf.mxu0
    %977 = vdwg.mxu0
    %978 = vmatprep.subr.mxu0 0.0
    %979 = vmatpush1.msra.mxu0 0.0
    %980 = vmatprep.subr.mxu0 0.0
    %981 = vmatpush1.msra.mxu0 0.0
    %982 = vmatprep.subr.mxu0 0.0
    %983 = vmatpush1.msra.mxu0 0.0
    %984 = vmatprep.subr.mxu0 0.0
    %985 = vmatpush1.msra.mxu0 0.0
    %986 = vmatprep.subr.mxu0 0.0
    %987 = vmatpush1.msra.mxu0 0.0
    %988 = vmatprep.subr.mxu0 0.0
    %989 = vmatpush1.msra.mxu0 0.0
    %990 = vmatprep.subr.mxu0 0.0
    %991 = vmatpush1.msra.mxu0 0.0
    %992 = vmatprep.subr.mxu0 0.0
    %993 = vmatpush1.msra.mxu0 0.0
    %994 = vmatprep.subr.mxu0 0.0
    %995 = vmatpush1.msra.mxu0 0.0
    %996 = vmatprep.subr.mxu0 0.0
    %997 = vmatpush1.msra.mxu0 0.0
    %998 = vmatprep.subr.mxu0 0.0
    %999 = vmatpush1.msra.mxu0 0.0
    %1000 = vmatprep.subr.mxu0 0.0
    %1001 = vmatpush1.msra.mxu0 0.0
    %1002 = vmatprep.subr.mxu0 0.0
    %v1003 = vand.u32 %v560, 4294901760
    %1004 = vmatpush1.msra.mxu0 %v1003
    %1005 = vmatprep.subr.mxu0 0.0
    %v1006 = vand.u32 %v559, 4294901760
    %1007 = vmatpush1.msra.mxu0 %v1006
    %1008 = vmatprep.subr.mxu0 0.0
    %v1009 = vand.u32 %v558, 4294901760
    %1010 = vmatpush1.msra.mxu0 %v1009
    %1011 = vmatprep.subr.mxu0 0.0
    %v1012 = vand.u32 %v557, 4294901760
    %1013 = vmatpush1.msra.mxu0 %v1012
    %1014 = vmatprep.subr.mxu0 0.0
    %1015 = vmatpush2.msra.mxu0 0.0
    %1016 = vmatprep.subr.mxu0 0.0
    %1017 = vmatpush2.msra.mxu0 0.0
    %1018 = vmatprep.subr.mxu0 0.0
    %1019 = vmatpush2.msra.mxu0 0.0
    %1020 = vmatprep.subr.mxu0 0.0
    %1021 = vmatpush2.msra.mxu0 0.0
    %1022 = vmatprep.subr.mxu0 0.0
    %1023 = vmatpush2.msra.mxu0 0.0
    %1024 = vmatprep.subr.mxu0 0.0
    %1025 = vmatpush2.msra.mxu0 0.0
    %1026 = vmatprep.subr.mxu0 0.0
    %1027 = vmatpush2.msra.mxu0 0.0
    %1028 = vmatprep.subr.mxu0 0.0
    %1029 = vmatpush2.msra.mxu0 0.0
    %1030 = vmatprep.subr.mxu0 0.0
    %1031 = vmatpush2.msra.mxu0 0.0
    %1032 = vmatprep.subr.mxu0 0.0
    %1033 = vmatpush2.msra.mxu0 0.0
    %1034 = vmatprep.subr.mxu0 0.0
    %1035 = vmatpush2.msra.mxu0 0.0
    %1036 = vmatprep.subr.mxu0 0.0
    %1037 = vmatpush2.msra.mxu0 0.0
    %1038 = vmatprep.subr.mxu0 0.0
    %1039 = vmatpush2.msra.mxu0 0.0
    %1040 = vmatprep.subr.mxu0 0.0
    %1041 = vmatpush2.msra.mxu0 0.0
    %1042 = vmatprep.subr.mxu0 0.0
    %1043 = vmatpush2.msra.mxu0 0.0
    %1044 = vmatprep.subr.mxu0 0.0
    %1045 = vmatpush2.msra.mxu0 0.0
    %1046 = vmatprep.mubr.f32.mxu0 0.0
    %v1047 = vand.u32 %v566, 4294901760
    %1048 = vmatmul.mubr.f32.gmra.mxu0 %v1047
    %v1049 = vpop.f32.mrf.mxu0
    %v1050 = vadd.f32 %v975, %v1049
    %v1051 = vpop.f32.mrf.mxu0
    %1052 = vdwg.mxu0
    %v1053 = vtanh.pop %v1050
    %v1054 = vld [vmem:[%s4] sm:$0x1]
    %v1056 = vlaneseq
    %v1057 = vshrl.u32 %v1056, 7
    %v1058 = vsub.s32 0, %v1057
    %v1059 = vrot.slane %v1054, %v1058
    %v1061 = vmul.f32 %v1053, %v1059
    %vm1062 = vcmask 256000
    %v1063 = vsel %vm1062, %v1061, 0.0
    %1064 = vadd.xlane.f32.xlu0 %v1063
    %v1065 = vpop.xlane.xlu0 %1064
    %vm1066 = vcmask 1042432
    %v1067 = vsel %vm1066, %v1065, -inf
    %v1068 = vrot.slane %v1067, 4
    %v1069 = vmax.f32 %v1067, %v1068
    %v1070 = vrot.slane %v1069, 2
    %v1071 = vmax.f32 %v1069, %v1070
    %v1072 = vrot.slane %v1071, 1
    %v1073 = vmax.f32 %v1071, %v1072
    %v1074 = vsub.f32 %v1065, %v1073
    %v1075 = vmul.f32 %v1074, 1.442695
    %v1076 = vpow.pop %v1075
    %v1077 = vsel %vm1066, %v1076, 0.0
    %v1078 = vrot.slane %v1077, 4
    %v1079 = vadd.f32 %v1077, %v1078
    %v1080 = vrot.slane %v1079, 2
    %v1081 = vadd.f32 %v1079, %v1080
    %v1082 = vrot.slane %v1081, 1
    %v1083 = vadd.f32 %v1081, %v1082
    %v1084 = vlog2.pop %v1083
    %v1085 = vmul.f32 %v1084, 0.6931472
    %v1086 = vsub.f32 %v1074, %v1085
    %vm1087 = vcmask 2048
    %1088 = vst.msk [vmem:[%s5] sm:$0x7] %vm1087, %v1086
    %v1089 = vmul.f32 %v1086, %v62
    %v1090 = vsel %vm1062, %v1089, 0.0
    %v1091 = vrot.slane %v1090, 4
    %v1092 = vadd.f32 %v1090, %v1091
    %v1093 = vrot.slane %v1092, 2
    %v1094 = vadd.f32 %v1092, %v1093
    %v1095 = vrot.slane %v1094, 1
    %v1096 = vadd.f32 %v1094, %v1095
    %vm1097 = vcmask 253952
    %1098 = vst.msk [vmem:[#allocation8] sm:$0x1] %vm1097, %v1096
    // Predicated region
    $region34: #{tpu_custom_call.1} parent=1 // pred_check
      _
    $region35: #{tpu_custom_call.1} parent=1 // pred_check_branch
      %1100 = sbr.rel (0) target = $region37
    $region36: #{tpu_custom_call.1} parent=1 // pred_region
      _
    $region37: #{tpu_custom_call.1} parent=1 // pred_fallthru
      _
    // Predicated region
    $region38: #{tpu_custom_call.1} parent=1 // pred_check
      _
    $region39: #{tpu_custom_call.1} parent=1 // pred_check_branch
      %1102 = sbr.rel (0) target = $region41
    $region40: #{tpu_custom_call.1} parent=1 // pred_region
      %s1104 = ssub.s32 16, 16
      %1105 = vsyncadd [#allocation4], %s1104
      %s1107 = sshll.u32 [#allocation8], 4
      %s1108 = int_to_ptr.vmem [resolvable:$true] %s1107
      %1110 = dma.vmem_to_hbm [thread:$0]  %s1108, 16, %s6, [#allocation4]
    $region41: #{tpu_custom_call.1} parent=1 // pred_fallthru
      _
    // Predicated region
    $region42: #{tpu_custom_call.1} parent=1 // pred_check
      _
    $region43: #{tpu_custom_call.1} parent=1 // pred_check_branch
      %1112 = sbr.rel (0) target = $region45
    $region44: #{tpu_custom_call.1} parent=1 // pred_region
      _
    $region45: #{tpu_custom_call.1} parent=1 // pred_fallthru
      _
    // Predicated region
    $region46: #{tpu_custom_call.1} parent=1 // pred_check
      _
    $region47: #{tpu_custom_call.1} parent=1 // pred_check_branch
      %1114 = sbr.rel (0) target = $region49
    $region48: #{tpu_custom_call.1} parent=1 // pred_region
      %1115 = dma.done [#allocation4], 16
    $region49: #{tpu_custom_call.1} parent=1 // pred_fallthru
      _
    %1116 = vsyncpa [#allocation3], 1
    %1117 = vsyncpa [#allocation6], 1
    %1118 = vsyncpa [#allocation4], 1

</llo_original>
